<compile_context>
chip_gen: v7x
topology: tpu7x:2x2x1
jax: 0.10.0
libtpu: 0.0.40
codegen_flags: <defaults>
</compile_context>

<pallas_src>
import functools

import jax
import jax.numpy as jnp
from jax import lax
from jax.experimental import pallas as pl
from jax.experimental.pallas import tpu as pltpu

LN_EPS = 1e-5


def _round_up(x, m):
    return ((x + m - 1) // m) * m


def _vmem_capacity_bytes():
    """Per-core VMEM capacity; conservative (v7x-safe) fallback if the query fails."""
    try:
        cap = getattr(pltpu.get_tpu_info(), "vmem_capacity_bytes", None)
        if cap:
            return int(cap)
    except Exception:
        pass
    return 64 << 20


def _pick_tile_rows(rows, cap):
    """Row tile (multiple of 8, <= cap) minimizing padded rows, then maximizing size."""
    cap = max(8, min(int(cap), _round_up(rows, 8)))
    cap = (cap // 8) * 8
    best_t, best_pad = 8, _round_up(rows, 8) - rows
    for t in range(8, cap + 1, 8):
        pad = _round_up(rows, t) - rows
        if pad < best_pad or (pad == best_pad and t > best_t):
            best_t, best_pad = t, pad
    return best_t


def _single_buffered_spec(block_shape, index_map):
    """Grid-invariant input: request single buffering (halves its VMEM footprint)."""
    try:
        return pl.BlockSpec(block_shape, index_map, pipeline_mode=pl.Buffered(1))
    except Exception:  # very old jax: fall back to the default (double-buffered) spec
        return pl.BlockSpec(block_shape, index_map)


def _layernorm(z, gamma, beta, inv_d, d_valid, d_pad, out_dtype):
    # Padded lanes of z are exactly zero (zero-padded weights/bias/x), so raw sums
    # divided by the true feature count give the correct mean.
    mean = jnp.sum(z, axis=-1, keepdims=True) * inv_d
    zc = z - mean
    if d_valid < d_pad:
        lane = lax.broadcasted_iota(jnp.int32, z.shape, dimension=1)
        zc = jnp.where(lane < d_valid, zc, 0.0)     # mask padded lanes for the variance
    var = jnp.sum(zc * zc, axis=-1, keepdims=True) * inv_d   # centered (two-pass) variance
    zn = zc * lax.rsqrt(var + LN_EPS)
    return (zn * gamma + beta).astype(out_dtype)


# ---------------------------------------------------------------------------
# Kernels
# ---------------------------------------------------------------------------
def mlp_kernel_resident(x_ref, w1_ref, b1_ref, w2_ref, b2_ref, g_ref, beta_ref, o_ref,
                        *, inv_d, d_valid, d_pad):
    """Weights fully VMEM-resident: one grid axis over row tiles."""
    xb = x_ref[...].astype(jnp.bfloat16)                                   # (tr, Dp)
    h = jnp.dot(xb, w1_ref[...], preferred_element_type=jnp.float32) + b1_ref[...]
    h = jnp.maximum(h, 0.0)                                                # (tr, Hp) f32
    y = jnp.dot(h.astype(jnp.bfloat16), w2_ref[...],
                preferred_element_type=jnp.float32)                        # (tr, Dp) f32
    # dropout: eval-mode identity
    # TODO(synk): training-mode dropout would use pltpu.prng_seed / prng_random_bits.
    z = y + b2_ref[...] + x_ref[...].astype(jnp.float32)                   # residual in f32
    o_ref[...] = _layernorm(z, g_ref[...], beta_ref[...], inv_d, d_valid, d_pad, o_ref.dtype)


def mlp_kernel_stream(x_ref, w1_ref, b1_ref, w2_ref, b2_ref, g_ref, beta_ref, o_ref,
                      acc_ref, xb_ref, *, inv_d, d_valid, d_pad):
    """Weights streamed over an 'arbitrary' H axis; f32 accumulator in VMEM scratch."""
    k = pl.program_id(1)

    @pl.when(k == 0)
    def _():
        # Cache the bf16 cast of the x tile once per row tile; reused by every H step.
        xb_ref[...] = x_ref[...].astype(jnp.bfloat16)

    h = jnp.dot(xb_ref[...], w1_ref[...], preferred_element_type=jnp.float32) + b1_ref[...]
    h = jnp.maximum(h, 0.0)                                                # (tr, th) f32
    partial = jnp.dot(h.astype(jnp.bfloat16), w2_ref[...],
                      preferred_element_type=jnp.float32)                  # (tr, Dp) f32

    @pl.when(k == 0)
    def _():
        # First H step stores directly (no zero-fill pass) and folds in bias2 + residual,
        # removing a full-tile store + an epilogue add (helps v5e's single vst slot).
        acc_ref[...] = partial + b2_ref[...] + x_ref[...].astype(jnp.float32)

    @pl.when(k > 0)
    def _():
        acc_ref[...] += partial

    @pl.when(k == pl.num_programs(1) - 1)
    def _():
        o_ref[...] = _layernorm(acc_ref[...], g_ref[...], beta_ref[...],
                                inv_d, d_valid, d_pad, o_ref.dtype)


# ---------------------------------------------------------------------------
# Wrapper
# ---------------------------------------------------------------------------
def mlp_forward(x, w1, b1, w2, b2, gamma, beta, *, force_streaming=False, tile_h=None):
    """x: [B, S, D] float32.  Weights stored as (in, out) so the kernel does x @ W."""
    B, S, D = x.shape
    H = w1.shape[1]
    R = B * S

    D_pad = _round_up(D, 128)
    H_pad = _round_up(H, 128)

    cap = _vmem_capacity_bytes()
    budget = max(cap - (12 << 20), 24 << 20)          # headroom for compiler scratch

    weights_bytes = 2 * D_pad * H_pad * 2             # W1 + W2, bf16, single-buffered
    small_bytes = (H_pad + 3 * D_pad) * 4             # b1 / b2 / gamma / beta
    # resident-path per-row VMEM: x + out (f32, dbl-buffered) + h (f32 + bf16) + xb (bf16)
    resident_row_bytes = 4 * D_pad * 4 + H_pad * 6 + D_pad * 2
    use_resident = (not force_streaming
                    and weights_bytes + small_bytes + 128 * resident_row_bytes <= budget)

    def _pad_all(R_pad):
        x2 = jnp.pad(x.reshape(R, D), ((0, R_pad - R), (0, D_pad - D)))
        w1p = jnp.pad(w1, ((0, D_pad - D), (0, H_pad - H))).astype(jnp.bfloat16)
        b1p = jnp.pad(b1, ((0, 0), (0, H_pad - H)))
        w2p = jnp.pad(w2, ((0, H_pad - H), (0, D_pad - D))).astype(jnp.bfloat16)
        b2p = jnp.pad(b2, ((0, 0), (0, D_pad - D)))
        gp = jnp.pad(gamma, ((0, 0), (0, D_pad - D)))
        bp = jnp.pad(beta, ((0, 0), (0, D_pad - D)))
        return x2, w1p, b1p, w2p, b2p, gp, bp

    if use_resident:
        # ---------------- weights-resident path ----------------
        rows_cap = (budget - weights_bytes - small_bytes) // resident_row_bytes
        tile_rows = _pick_tile_rows(R, min(rows_cap, 512))
        R_pad = _round_up(R, tile_rows)
        x2, w1p, b1p, w2p, b2p, gp, bp = _pad_all(R_pad)

        vmem_bytes = (2 * weights_bytes + 2 * small_bytes       # safety: even if dbl-buffered
                      + tile_rows * resident_row_bytes + (8 << 20))
        vmem_bytes = max(min(int(vmem_bytes), cap - (2 << 20)), 16 << 20)

        cost = pl.CostEstimate(
            flops=4 * R_pad * D_pad * H_pad,
            transcendentals=R_pad,
            bytes_accessed=int(x2.size * 4 + R_pad * D_pad * 4   # x in + out
                               + weights_bytes + small_bytes),    # weights read exactly once
        )

        out = pl.pallas_call(
            functools.partial(mlp_kernel_resident, inv_d=1.0 / D, d_valid=D, d_pad=D_pad),
            out_shape=jax.ShapeDtypeStruct((R_pad, D_pad), x.dtype),
            grid_spec=pltpu.PrefetchScalarGridSpec(
                num_scalar_prefetch=0,
                grid=(R_pad // tile_rows,),
                in_specs=[
                    pl.BlockSpec((tile_rows, D_pad), lambda i: (i, 0)),        # x tile
                    _single_buffered_spec((D_pad, H_pad), lambda i: (0, 0)),   # W1 resident
                    _single_buffered_spec((1, H_pad), lambda i: (0, 0)),       # b1
                    _single_buffered_spec((H_pad, D_pad), lambda i: (0, 0)),   # W2 resident
                    _single_buffered_spec((1, D_pad), lambda i: (0, 0)),       # b2
                    _single_buffered_spec((1, D_pad), lambda i: (0, 0)),       # gamma
                    _single_buffered_spec((1, D_pad), lambda i: (0, 0)),       # beta
                ],
                out_specs=pl.BlockSpec((tile_rows, D_pad), lambda i: (i, 0)),
            ),
            compiler_params=pltpu.CompilerParams(
                dimension_semantics=("parallel",),
                vmem_limit_bytes=int(vmem_bytes),
            ),
            cost_estimate=cost,
        )(x2, w1p, b1p, w2p, b2p, gp, bp)
        return out[:R, :D].reshape(B, S, D)

    # ---------------- H-streaming path (weights do not fit VMEM) ----------------
    if tile_h is None:
        tile_h = min(512, H_pad)
    tile_h = min(_round_up(tile_h, 128), H_pad)
    H_pad = _round_up(H_pad, tile_h)

    # per-row VMEM: x + out (f32, dbl-buffered) + acc (f32) + xb (bf16) + h (f32 + bf16)
    stream_row_bytes = 5 * D_pad * 4 + D_pad * 2 + tile_h * 6
    stream_fixed = 8 * D_pad * tile_h + 8 * tile_h + 3 * D_pad * 4
    rows_cap = max((budget - stream_fixed) // stream_row_bytes, 8)
    # weight-streaming arithmetic intensity ~= tile_rows flop/byte; 64 MiB parts (v7x)
    # cap at 512 rows (and keep >=2 row tiles when R is big, for megacore), 128 MiB parts
    # (v5e/v6e) go to 1024 to reach the MXU roofline.
    rows_target = 512 if cap <= (64 << 20) else 1024
    tile_rows = _pick_tile_rows(R, min(rows_cap, rows_target))
    R_pad = _round_up(R, tile_rows)
    x2, w1p, b1p, w2p, b2p, gp, bp = _pad_all(R_pad)

    grid = (R_pad // tile_rows, H_pad // tile_h)
    n_row_tiles = grid[0]

    vmem_bytes = stream_fixed + tile_rows * stream_row_bytes + (8 << 20)
    vmem_bytes = max(min(int(vmem_bytes), cap - (2 << 20)), 16 << 20)

    cost = pl.CostEstimate(
        flops=4 * R_pad * D_pad * H_pad,
        transcendentals=R_pad,
        # weights are re-streamed once per row tile in this configuration
        bytes_accessed=int(x2.size * 4 + R_pad * D_pad * 4
                           + n_row_tiles * (w1p.size * 2 + w2p.size * 2)
                           + small_bytes),
    )

    out = pl.pallas_call(
        functools.partial(mlp_kernel_stream, inv_d=1.0 / D, d_valid=D, d_pad=D_pad),
        out_shape=jax.ShapeDtypeStruct((R_pad, D_pad), x.dtype),
        grid_spec=pltpu.PrefetchScalarGridSpec(
            num_scalar_prefetch=0,
            grid=grid,
            in_specs=[
                pl.BlockSpec((tile_rows, D_pad), lambda i, k: (i, 0)),          # x tile
                pl.BlockSpec((D_pad, tile_h), lambda i, k: (0, k)),             # W1 H-chunk
                pl.BlockSpec((1, tile_h), lambda i, k: (0, k)),                 # b1 H-chunk
                pl.BlockSpec((tile_h, D_pad), lambda i, k: (k, 0)),             # W2 H-chunk
                _single_buffered_spec((1, D_pad), lambda i, k: (0, 0)),         # b2
                _single_buffered_spec((1, D_pad), lambda i, k: (0, 0)),         # gamma
                _single_buffered_spec((1, D_pad), lambda i, k: (0, 0)),         # beta
            ],
            out_specs=pl.BlockSpec((tile_rows, D_pad), lambda i, k: (i, 0)),
            scratch_shapes=[pltpu.VMEM((tile_rows, D_pad), jnp.float32),        # acc
                            pltpu.VMEM((tile_rows, D_pad), jnp.bfloat16)],      # cached bf16 x
        ),
        compiler_params=pltpu.CompilerParams(
            dimension_semantics=("parallel", "arbitrary"),
            vmem_limit_bytes=int(vmem_bytes),
        ),
        cost_estimate=cost,
    )(x2, w1p, b1p, w2p, b2p, gp, bp)

    return out[:R, :D].reshape(B, S, D)


# ---------------------------------------------------------------------------
# Params / reference / test
# ---------------------------------------------------------------------------
def init_params(key, input_dim, hidden_dim):
    """Deterministic synthetic params (PyTorch nn.Linear-style uniform init)."""
    k1, k2, k3, k4 = jax.random.split(key, 4)
    bound1 = 1.0 / (input_dim ** 0.5)
    bound2 = 1.0 / (hidden_dim ** 0.5)
    # stored transposed relative to PyTorch: (in_features, out_features)
    w1 = jax.random.uniform(k1, (input_dim, hidden_dim), jnp.float32, -bound1, bound1)
    b1 = jax.random.uniform(k2, (1, hidden_dim), jnp.float32, -bound1, bound1)
    w2 = jax.random.uniform(k3, (hidden_dim, input_dim), jnp.float32, -bound2, bound2)
    b2 = jax.random.uniform(k4, (1, input_dim), jnp.float32, -bound2, bound2)
    gamma = jnp.ones((1, input_dim), jnp.float32)
    beta = jnp.zeros((1, input_dim), jnp.float32)
    return w1, b1, w2, b2, gamma, beta


def mlp_reference(x, w1, b1, w2, b2, gamma, beta):
    """Pure-JAX reference with the same numerics as the kernel (bf16 MXU, f32 acc/LN)."""
    h = jnp.dot(x.astype(jnp.bfloat16), w1.astype(jnp.bfloat16),
                preferred_element_type=jnp.float32) + b1[0]
    h = jnp.maximum(h, 0.0)
    y = jnp.dot(h.astype(jnp.bfloat16), w2.astype(jnp.bfloat16),
                preferred_element_type=jnp.float32) + b2[0]
    z = y + x
    mean = jnp.mean(z, axis=-1, keepdims=True)
    var = jnp.mean((z - mean) ** 2, axis=-1, keepdims=True)
    return (z - mean) / jnp.sqrt(var + LN_EPS) * gamma[0] + beta[0]


if __name__ == "__main__":
    key = jax.random.PRNGKey(0)
    kx, kp, kx2, kp2 = jax.random.split(key, 4)

    # 1) default path (small weights -> VMEM-resident configuration)
    B, S, D, H = 2, 8, 32, 64
    x = jax.random.normal(kx, (B, S, D), jnp.float32)
    params = init_params(kp, D, H)
    out = jax.block_until_ready(mlp_forward(x, *params))
    ref = mlp_reference(x, *params)
    assert out.shape == (B, S, D)
    assert jnp.allclose(out, ref, atol=2e-3, rtol=2e-3), "resident path mismatch"

    # 2) H-streaming path (forced), ragged D/H to exercise padding + the LN lane mask
    B2, S2, D2, H2 = 2, 24, 200, 384
    x2 = jax.random.normal(kx2, (B2, S2, D2), jnp.float32)
    params2 = init_params(kp2, D2, H2)
    out2 = jax.block_until_ready(
        mlp_forward(x2, *params2, force_streaming=True, tile_h=128))
    ref2 = mlp_reference(x2, *params2)
    assert out2.shape == (B2, S2, D2)
    assert jnp.allclose(out2, ref2, atol=2e-3, rtol=2e-3), "streaming path mismatch"

    print("KERNEL_OK")
</pallas_src>

<mosaic_0001>
module attributes {stable_mosaic.version = 11 : i64} {
  func.func @mlp_kernel_resident(%arg0: i32, %arg1: memref<16x128xf32, #tpu.memory_space<vmem>>, %arg2: memref<128x128xbf16, #tpu.memory_space<vmem>>, %arg3: memref<1x128xf32, #tpu.memory_space<vmem>>, %arg4: memref<128x128xbf16, #tpu.memory_space<vmem>>, %arg5: memref<1x128xf32, #tpu.memory_space<vmem>>, %arg6: memref<1x128xf32, #tpu.memory_space<vmem>>, %arg7: memref<1x128xf32, #tpu.memory_space<vmem>>, %arg8: memref<16x128xf32, #tpu.memory_space<vmem>>) attributes {dimension_semantics = [#tpu.dimension_semantics<parallel>], iteration_bounds = array<i64: 1>, scalar_prefetch = 0 : i64, scratch_operands = 0 : i64, tpu.core_type = #tpu.core_type<tc>, window_params = [{transform_indices = @transform_0, window_bounds = array<i64: 16, 128>}, {pipeline_mode = #tpu.pipeline_mode<synchronous>, transform_indices = @transform_1, window_bounds = array<i64: 128, 128>}, {pipeline_mode = #tpu.pipeline_mode<synchronous>, transform_indices = @transform_2, window_bounds = array<i64: 1, 128>}, {pipeline_mode = #tpu.pipeline_mode<synchronous>, transform_indices = @transform_3, window_bounds = array<i64: 128, 128>}, {pipeline_mode = #tpu.pipeline_mode<synchronous>, transform_indices = @transform_4, window_bounds = array<i64: 1, 128>}, {pipeline_mode = #tpu.pipeline_mode<synchronous>, transform_indices = @transform_5, window_bounds = array<i64: 1, 128>}, {pipeline_mode = #tpu.pipeline_mode<synchronous>, transform_indices = @transform_6, window_bounds = array<i64: 1, 128>}, {transform_indices = @transform_7, window_bounds = array<i64: 16, 128>}]} {
    %c0 = arith.constant 0 : index
    %c0_0 = arith.constant 0 : index
    %0 = vector.load %arg1[%c0, %c0_0] : memref<16x128xf32, #tpu.memory_space<vmem>>, vector<16x128xf32>
    %1 = arith.truncf %0 : vector<16x128xf32> to vector<16x128xbf16>
    %c0_1 = arith.constant 0 : index
    %c0_2 = arith.constant 0 : index
    %2 = vector.load %arg2[%c0_1, %c0_2] : memref<128x128xbf16, #tpu.memory_space<vmem>>, vector<128x128xbf16>
    %cst = arith.constant dense<0.000000e+00> : vector<16x128xf32>
    %3 = tpu.matmul %1, %2, %cst {dimension_numbers = #tpu.dot_dimension_numbers<[1], [0], [0], [1], [0, 0, 1, 1], [], []>} : vector<16x128xbf16>, vector<128x128xbf16>, vector<16x128xf32> -> vector<16x128xf32>
    %c0_3 = arith.constant 0 : index
    %c0_4 = arith.constant 0 : index
    %4 = vector.load %arg3[%c0_3, %c0_4] : memref<1x128xf32, #tpu.memory_space<vmem>>, vector<1x128xf32>
    %5 = vector.broadcast %4 : vector<1x128xf32> to vector<16x128xf32>
    %6 = arith.addf %3, %5 : vector<16x128xf32>
    %cst_5 = arith.constant 0.000000e+00 : f32
    %7 = vector.broadcast %cst_5 : f32 to vector<16x128xf32>
    %8 = arith.maximumf %6, %7 : vector<16x128xf32>
    %9 = arith.truncf %8 : vector<16x128xf32> to vector<16x128xbf16>
    %c0_6 = arith.constant 0 : index
    %c0_7 = arith.constant 0 : index
    %10 = vector.load %arg4[%c0_6, %c0_7] : memref<128x128xbf16, #tpu.memory_space<vmem>>, vector<128x128xbf16>
    %cst_8 = arith.constant dense<0.000000e+00> : vector<16x128xf32>
    %11 = tpu.matmul %9, %10, %cst_8 {dimension_numbers = #tpu.dot_dimension_numbers<[1], [0], [0], [1], [0, 0, 1, 1], [], []>} : vector<16x128xbf16>, vector<128x128xbf16>, vector<16x128xf32> -> vector<16x128xf32>
    %c0_9 = arith.constant 0 : index
    %c0_10 = arith.constant 0 : index
    %12 = vector.load %arg5[%c0_9, %c0_10] : memref<1x128xf32, #tpu.memory_space<vmem>>, vector<1x128xf32>
    %13 = vector.broadcast %12 : vector<1x128xf32> to vector<16x128xf32>
    %14 = arith.addf %11, %13 : vector<16x128xf32>
    %c0_11 = arith.constant 0 : index
    %c0_12 = arith.constant 0 : index
    %15 = vector.load %arg1[%c0_11, %c0_12] : memref<16x128xf32, #tpu.memory_space<vmem>>, vector<16x128xf32>
    %16 = arith.addf %14, %15 : vector<16x128xf32>
    %c0_13 = arith.constant 0 : index
    %c0_14 = arith.constant 0 : index
    %17 = vector.load %arg6[%c0_13, %c0_14] : memref<1x128xf32, #tpu.memory_space<vmem>>, vector<1x128xf32>
    %c0_15 = arith.constant 0 : index
    %c0_16 = arith.constant 0 : index
    %18 = vector.load %arg7[%c0_15, %c0_16] : memref<1x128xf32, #tpu.memory_space<vmem>>, vector<1x128xf32>
    %cst_17 = arith.constant dense<0.000000e+00> : vector<16xf32>
    %19 = vector.multi_reduction <add>, %16, %cst_17 [1] : vector<16x128xf32> to vector<16xf32>
    %20 = vector.shape_cast %19 : vector<16xf32> to vector<16x1xf32>
    %cst_18 = arith.constant 3.125000e-02 : f32
    %21 = vector.broadcast %cst_18 : f32 to vector<16x1xf32>
    %22 = arith.mulf %20, %21 : vector<16x1xf32>
    %23 = vector.broadcast %22 : vector<16x1xf32> to vector<16x128xf32>
    %24 = arith.subf %16, %23 : vector<16x128xf32>
    %25 = tpu.iota {dimensions = array<i32: 1>} : vector<16x128xi32>
    %c32_i32 = arith.constant 32 : i32
    %26 = vector.broadcast %c32_i32 : i32 to vector<16x128xi32>
    %27 = arith.cmpi slt, %25, %26 : vector<16x128xi32>
    %cst_19 = arith.constant 0.000000e+00 : f32
    %28 = vector.broadcast %cst_19 : f32 to vector<16x128xf32>
    %29 = arith.select %27, %24, %28 : vector<16x128xi1>, vector<16x128xf32>
    %30 = arith.mulf %29, %29 : vector<16x128xf32>
    %cst_20 = arith.constant dense<0.000000e+00> : vector<16xf32>
    %31 = vector.multi_reduction <add>, %30, %cst_20 [1] : vector<16x128xf32> to vector<16xf32>
    %32 = vector.shape_cast %31 : vector<16xf32> to vector<16x1xf32>
    %cst_21 = arith.constant 3.125000e-02 : f32
    %33 = vector.broadcast %cst_21 : f32 to vector<16x1xf32>
    %34 = arith.mulf %32, %33 : vector<16x1xf32>
    %cst_22 = arith.constant 9.99999974E-6 : f32
    %35 = vector.broadcast %cst_22 : f32 to vector<16x1xf32>
    %36 = arith.addf %34, %35 : vector<16x1xf32>
    %37 = math.rsqrt %36 : vector<16x1xf32>
    %38 = vector.broadcast %37 : vector<16x1xf32> to vector<16x128xf32>
    %39 = arith.mulf %29, %38 : vector<16x128xf32>
    %40 = vector.broadcast %17 : vector<1x128xf32> to vector<16x128xf32>
    %41 = arith.mulf %39, %40 : vector<16x128xf32>
    %42 = vector.broadcast %18 : vector<1x128xf32> to vector<16x128xf32>
    %43 = arith.addf %41, %42 : vector<16x128xf32>
    %c0_23 = arith.constant 0 : index
    %c0_24 = arith.constant 0 : index
    %44 = vector.load %arg8[%c0_23, %c0_24] : memref<16x128xf32, #tpu.memory_space<vmem>>, vector<16x128xf32>
    tpu.vector_store %arg8[%c0_23, %c0_24], %43 {strides = array<i32>} : memref<16x128xf32, #tpu.memory_space<vmem>>, vector<16x128xf32>,
    return
  }
  func.func @transform_0(%arg0: i32) -> (i32, i32) {
    %c0_i32 = arith.constant 0 : i32
    %c0_i32_0 = arith.constant 0 : i32
    return %arg0, %c0_i32 : i32, i32
  }
  func.func @transform_1(%arg0: i32) -> (i32, i32) {
    %c0_i32 = arith.constant 0 : i32
    %c0_i32_0 = arith.constant 0 : i32
    %c0_i32_1 = arith.constant 0 : i32
    return %c0_i32, %c0_i32_0 : i32, i32
  }
  func.func @transform_2(%arg0: i32) -> (i32, i32) {
    %c0_i32 = arith.constant 0 : i32
    %c0_i32_0 = arith.constant 0 : i32
    %c0_i32_1 = arith.constant 0 : i32
    return %c0_i32, %c0_i32_0 : i32, i32
  }
  func.func @transform_3(%arg0: i32) -> (i32, i32) {
    %c0_i32 = arith.constant 0 : i32
    %c0_i32_0 = arith.constant 0 : i32
    %c0_i32_1 = arith.constant 0 : i32
    return %c0_i32, %c0_i32_0 : i32, i32
  }
  func.func @transform_4(%arg0: i32) -> (i32, i32) {
    %c0_i32 = arith.constant 0 : i32
    %c0_i32_0 = arith.constant 0 : i32
    %c0_i32_1 = arith.constant 0 : i32
    return %c0_i32, %c0_i32_0 : i32, i32
  }
  func.func @transform_5(%arg0: i32) -> (i32, i32) {
    %c0_i32 = arith.constant 0 : i32
    %c0_i32_0 = arith.constant 0 : i32
    %c0_i32_1 = arith.constant 0 : i32
    return %c0_i32, %c0_i32_0 : i32, i32
  }
  func.func @transform_6(%arg0: i32) -> (i32, i32) {
    %c0_i32 = arith.constant 0 : i32
    %c0_i32_0 = arith.constant 0 : i32
    %c0_i32_1 = arith.constant 0 : i32
    return %c0_i32, %c0_i32_0 : i32, i32
  }
  func.func @transform_7(%arg0: i32) -> (i32, i32) {
    %c0_i32 = arith.constant 0 : i32
    %c0_i32_0 = arith.constant 0 : i32
    return %arg0, %c0_i32 : i32, i32
  }
}

</mosaic_0001>

<llo_original>
// kernel: tpu_custom_call.1
$region0: #{tpu_custom_call.1}
  #allocation0 [shape = 'u32[]', space=smem, size = 0x4, offset = 0x4, fixed_abs, tag = 'smem constant byte address 0x4 - core index']
  #allocation1 [shape = 'u32[144,128]{1,0:T(1,128)}', space=vmem, size = 0x12000, scoped, tag = 'internal scratch']
  %s0 = inlined_call_operand.hbm [shape: f32[16,128], index: 0, kind: input, shape index: {}]
  %s1 = inlined_call_operand.hbm [shape: bf16[128,128], index: 1, kind: input, shape index: {}]
  %s2 = inlined_call_operand.vmem [shape: f32[1,128], index: 2, kind: input, shape index: {}]
  %s3 = inlined_call_operand.hbm [shape: bf16[128,128], index: 3, kind: input, shape index: {}]
  %s4 = inlined_call_operand.vmem [shape: f32[1,128], index: 4, kind: input, shape index: {}]
  %s5 = inlined_call_operand.vmem [shape: f32[1,128], index: 5, kind: input, shape index: {}]
  %s6 = inlined_call_operand.vmem [shape: f32[1,128], index: 6, kind: input, shape index: {}]
  %s7 = inlined_call_operand.hbm [shape: f32[16,128], index: 7, kind: output, shape index: {}]
  %s8 = sld [smem:[#allocation0]]
  $region50: #{tpu_custom_call.1} parent=0
    _
  %s10 = ssub.s32 1, %s8
  %s11 = scalar_select 0, %s10, %s8
  $region1: #{tpu_custom_call.1} parent=0
    #allocation2 [shape = 'u8[8192]{0}', space=vmem, size = 0x2000, scoped, tag = 'input window, operand 0, single buffered']
    #allocation3 [shape = 's32[1]{0}', space=sflag, size = 0x4, scoped, tag = 'scoped memory for tpu_custom_call.1']
    #allocation4 [shape = 's32[1]{0}', space=sflag, size = 0x4, scoped, tag = 'scoped memory for tpu_custom_call.1']
    #allocation5 [shape = 'u8[32768]{0}', space=vmem, size = 0x8000, scoped, tag = 'input window, operand 1, single buffered']
    #allocation6 [shape = 's32[1]{0}', space=sflag, size = 0x4, scoped, tag = 'scoped memory for tpu_custom_call.1']
    #allocation7 [shape = 'u8[32768]{0}', space=vmem, size = 0x8000, scoped, tag = 'input window, operand 3, single buffered']
    #allocation8 [shape = 'u8[8192]{0}', space=vmem, size = 0x2000, scoped, tag = 'output window, operand 0, single buffered']
    %12 = vsyncpa [#allocation3], 0
    %13 = vsyncpa [#allocation6], 0
    %14 = vsyncpa [#allocation4], 0
    // Predicated region
    $region2: #{tpu_custom_call.1} parent=1 // pred_check
      _
    $region3: #{tpu_custom_call.1} parent=1 // pred_check_branch
      %16 = sbr.rel (0) target = $region5
    $region4: #{tpu_custom_call.1} parent=1 // pred_region
      %s18 = ssub.s32 256, 256
      %19 = vsyncadd [#allocation3], %s18
      %s20 = sshll.u32 [#allocation2], 4
      %s21 = int_to_ptr.vmem [resolvable:$true] %s20
      %26 = dma.hbm_to_vmem [thread:$0]  %s0, 256, %s21, [#allocation3], 128, 128, 8
    $region5: #{tpu_custom_call.1} parent=1 // pred_fallthru
      _
    // Predicated region
    $region6: #{tpu_custom_call.1} parent=1 // pred_check
      _
    $region7: #{tpu_custom_call.1} parent=1 // pred_check_branch
      %28 = sbr.rel (0) target = $region9
    $region8: #{tpu_custom_call.1} parent=1 // pred_region
      %s30 = ssub.s32 1024, 1024
      %31 = vsyncadd [#allocation6], %s30
      %s32 = sshll.u32 [#allocation5], 4
      %s33 = int_to_ptr.vmem [resolvable:$true] %s32
      %38 = dma.hbm_to_vmem [thread:$0]  %s1, 1024, %s33, [#allocation6], 64, 64, 4
    $region9: #{tpu_custom_call.1} parent=1 // pred_fallthru
      _
    // Predicated region
    $region10: #{tpu_custom_call.1} parent=1 // pred_check
      _
    $region11: #{tpu_custom_call.1} parent=1 // pred_check_branch
      %40 = sbr.rel (0) target = $region13
    $region12: #{tpu_custom_call.1} parent=1 // pred_region
      _
    $region13: #{tpu_custom_call.1} parent=1 // pred_fallthru
      _
    // Predicated region
    $region14: #{tpu_custom_call.1} parent=1 // pred_check
      _
    $region15: #{tpu_custom_call.1} parent=1 // pred_check_branch
      %42 = sbr.rel (0) target = $region17
    $region16: #{tpu_custom_call.1} parent=1 // pred_region
      %s44 = ssub.s32 1024, 1024
      %45 = vsyncadd [#allocation6], %s44
      %s46 = sshll.u32 [#allocation7], 4
      %s47 = int_to_ptr.vmem [resolvable:$true] %s46
      %52 = dma.hbm_to_vmem [thread:$0]  %s3, 1024, %s47, [#allocation6], 64, 64, 4
    $region17: #{tpu_custom_call.1} parent=1 // pred_fallthru
      _
    // Predicated region
    $region18: #{tpu_custom_call.1} parent=1 // pred_check
      _
    $region19: #{tpu_custom_call.1} parent=1 // pred_check_branch
      %54 = sbr.rel (0) target = $region21
    $region20: #{tpu_custom_call.1} parent=1 // pred_region
      _
    $region21: #{tpu_custom_call.1} parent=1 // pred_fallthru
      _
    // Predicated region
    $region22: #{tpu_custom_call.1} parent=1 // pred_check
      _
    $region23: #{tpu_custom_call.1} parent=1 // pred_check_branch
      %56 = sbr.rel (0) target = $region25
    $region24: #{tpu_custom_call.1} parent=1 // pred_region
      _
    $region25: #{tpu_custom_call.1} parent=1 // pred_fallthru
      _
    // Predicated region
    $region26: #{tpu_custom_call.1} parent=1 // pred_check
      _
    $region27: #{tpu_custom_call.1} parent=1 // pred_check_branch
      %58 = sbr.rel (0) target = $region29
    $region28: #{tpu_custom_call.1} parent=1 // pred_region
      _
    $region29: #{tpu_custom_call.1} parent=1 // pred_fallthru
      _
    // Predicated region
    $region30: #{tpu_custom_call.1} parent=1 // pred_check
      _
    $region31: #{tpu_custom_call.1} parent=1 // pred_check_branch
      %60 = sbr.rel (0) target = $region33
    $region32: #{tpu_custom_call.1} parent=1 // pred_region
      %61 = dma.done [#allocation3], 256
    $region33: #{tpu_custom_call.1} parent=1 // pred_fallthru
      _
    // Predicated region
    $region34: #{tpu_custom_call.1} parent=1 // pred_check
      _
    $region35: #{tpu_custom_call.1} parent=1 // pred_check_branch
      %63 = sbr.rel (0) target = $region37
    $region36: #{tpu_custom_call.1} parent=1 // pred_region
      %64 = dma.done [#allocation6], 1024
    $region37: #{tpu_custom_call.1} parent=1 // pred_fallthru
      _
    // Predicated region
    $region38: #{tpu_custom_call.1} parent=1 // pred_check
      _
    $region39: #{tpu_custom_call.1} parent=1 // pred_check_branch
      %66 = sbr.rel (0) target = $region41
    $region40: #{tpu_custom_call.1} parent=1 // pred_region
      %67 = dma.done [#allocation6], 1024
    $region41: #{tpu_custom_call.1} parent=1 // pred_fallthru
      _
    %v69 = vld [vmem:[#allocation2] sm:$0xff]
    %v70 = vld [vmem:[#allocation2 + $0x8] sm:$0xff]
    %v71 = vpack.c.bf16 %v70, %v69
    %v72 = vld [vmem:[#allocation5] sm:$0xf]
    %v73 = vld [vmem:[#allocation5 + $0x4] sm:$0xf]
    %v74 = vld [vmem:[#allocation5 + $0x8] sm:$0xf]
    %v75 = vld [vmem:[#allocation5 + $0xc] sm:$0xf]
    %v76 = vld [vmem:[#allocation5 + $0x10] sm:$0xf]
    %v77 = vld [vmem:[#allocation5 + $0x14] sm:$0xf]
    %v78 = vld [vmem:[#allocation5 + $0x18] sm:$0xf]
    %v79 = vld [vmem:[#allocation5 + $0x1c] sm:$0xf]
    %v80 = vld [vmem:[#allocation5 + $0x20] sm:$0xf]
    %v81 = vld [vmem:[#allocation5 + $0x24] sm:$0xf]
    %v82 = vld [vmem:[#allocation5 + $0x28] sm:$0xf]
    %v83 = vld [vmem:[#allocation5 + $0x2c] sm:$0xf]
    %v84 = vld [vmem:[#allocation5 + $0x30] sm:$0xf]
    %v85 = vld [vmem:[#allocation5 + $0x34] sm:$0xf]
    %v86 = vld [vmem:[#allocation5 + $0x38] sm:$0xf]
    %v87 = vld [vmem:[#allocation5 + $0x3c] sm:$0xf]
    %v88 = vld [vmem:[%s2] sm:$0x1]
    %v90 = vlaneseq
    %v91 = vshrl.u32 %v90, 7
    %v92 = vsub.s32 0, %v91
    %v93 = vrot.slane %v88, %v92
    %v111 = vunpack.c.l.b16 %v72
    %v112 = vunpack.c.l.b16 %v73
    %v113 = vunpack.c.l.b16 %v74
    %v114 = vunpack.c.l.b16 %v75
    %v115 = vunpack.c.l.b16 %v76
    %v116 = vunpack.c.l.b16 %v77
    %v117 = vunpack.c.l.b16 %v78
    %v118 = vunpack.c.l.b16 %v79
    %v119 = vunpack.c.l.b16 %v80
    %v120 = vunpack.c.l.b16 %v81
    %v121 = vunpack.c.l.b16 %v82
    %v122 = vunpack.c.l.b16 %v83
    %v123 = vunpack.c.l.b16 %v84
    %v124 = vunpack.c.l.b16 %v85
    %v125 = vunpack.c.l.b16 %v86
    %v126 = vunpack.c.l.b16 %v87
    %v127 = vpack.c.b16 %v112, %v111
    %v128 = vpack.c.b16 %v114, %v113
    %v129 = vpack.c.b16 %v116, %v115
    %v130 = vpack.c.b16 %v118, %v117
    %v131 = vpack.c.b16 %v120, %v119
    %v132 = vpack.c.b16 %v122, %v121
    %v133 = vpack.c.b16 %v124, %v123
    %v134 = vpack.c.b16 %v126, %v125
    %143 = vmatprep.subr.bf16.mxu0 0
    %144 = vmatpush1.bf16.msra.mxu0 %v127
    %145 = vmatprep.subr.bf16.mxu0 0
    %146 = vmatpush1.bf16.msra.mxu0 %v128
    %147 = vmatprep.subr.bf16.mxu0 0
    %148 = vmatpush1.bf16.msra.mxu0 %v129
    %149 = vmatprep.subr.bf16.mxu0 0
    %150 = vmatpush1.bf16.msra.mxu0 %v130
    %151 = vmatprep.subr.bf16.mxu0 0
    %152 = vmatpush1.bf16.msra.mxu0 %v131
    %153 = vmatprep.subr.bf16.mxu0 0
    %154 = vmatpush1.bf16.msra.mxu0 %v132
    %155 = vmatprep.subr.bf16.mxu0 0
    %156 = vmatpush1.bf16.msra.mxu0 %v133
    %157 = vmatprep.subr.bf16.mxu0 0
    %158 = vmatpush1.bf16.msra.mxu0 %v134
    %159 = vmatprep.subr.bf16.mxu0 0
    %160 = vmatpush1.bf16.msra.mxu0 0
    %161 = vmatprep.subr.bf16.mxu0 0
    %162 = vmatpush1.bf16.msra.mxu0 0
    %163 = vmatprep.subr.bf16.mxu0 0
    %164 = vmatpush1.bf16.msra.mxu0 0
    %165 = vmatprep.subr.bf16.mxu0 0
    %166 = vmatpush1.bf16.msra.mxu0 0
    %167 = vmatprep.subr.bf16.mxu0 0
    %168 = vmatpush1.bf16.msra.mxu0 0
    %169 = vmatprep.subr.bf16.mxu0 0
    %170 = vmatpush1.bf16.msra.mxu0 0
    %171 = vmatprep.subr.bf16.mxu0 0
    %172 = vmatpush1.bf16.msra.mxu0 0
    %173 = vmatprep.subr.bf16.mxu0 0
    %174 = vmatpush1.bf16.msra.mxu0 0
    %175 = vmatprep.mubr.bf16.mxu0 0
    %176 = vmatmul.mubr.bf16.gmra.mrb[0].mxu0 %v71
    %v177 = vpop.f32.mrb[0].mxu0
    %v178 = vadd.f32 %v93, %v177
    %v179 = vpop.f32.mrb[0].mxu0
    %v180 = vpop.f32.mrb[0].mxu0
    %v181 = vadd.f32 %v93, %v180
    %v182 = vpop.f32.mrb[0].mxu0
    %183 = vdwg.mxu0
    %v184 = vmax.f32 %v178, 0.0
    %v185 = vmax.f32 %v181, 0.0
    %v186 = vpack.c.bf16 %v185, %v184
    %v187 = vld [vmem:[#allocation7] sm:$0xf]
    %v188 = vld [vmem:[#allocation7 + $0x4] sm:$0xf]
    %v189 = vld [vmem:[#allocation7 + $0x8] sm:$0xf]
    %v190 = vld [vmem:[#allocation7 + $0xc] sm:$0xf]
    %v191 = vld [vmem:[#allocation7 + $0x10] sm:$0xf]
    %v192 = vld [vmem:[#allocation7 + $0x14] sm:$0xf]
    %v193 = vld [vmem:[#allocation7 + $0x18] sm:$0xf]
    %v194 = vld [vmem:[#allocation7 + $0x1c] sm:$0xf]
    %v195 = vld [vmem:[#allocation7 + $0x20] sm:$0xf]
    %v196 = vld [vmem:[#allocation7 + $0x24] sm:$0xf]
    %v197 = vld [vmem:[#allocation7 + $0x28] sm:$0xf]
    %v198 = vld [vmem:[#allocation7 + $0x2c] sm:$0xf]
    %v199 = vld [vmem:[#allocation7 + $0x30] sm:$0xf]
    %v200 = vld [vmem:[#allocation7 + $0x34] sm:$0xf]
    %v201 = vld [vmem:[#allocation7 + $0x38] sm:$0xf]
    %v202 = vld [vmem:[#allocation7 + $0x3c] sm:$0xf]
    %v203 = vld [vmem:[%s4] sm:$0x1]
    %v205 = vlaneseq
    %v206 = vshrl.u32 %v205, 7
    %v207 = vsub.s32 0, %v206
    %v208 = vrot.slane %v203, %v207
    %v226 = vunpack.c.l.b16 %v187
    %v227 = vunpack.c.l.b16 %v188
    %v228 = vunpack.c.l.b16 %v189
    %v229 = vunpack.c.l.b16 %v190
    %v230 = vunpack.c.l.b16 %v191
    %v231 = vunpack.c.l.b16 %v192
    %v232 = vunpack.c.l.b16 %v193
    %v233 = vunpack.c.l.b16 %v194
    %v234 = vunpack.c.l.b16 %v195
    %v235 = vunpack.c.l.b16 %v196
    %v236 = vunpack.c.l.b16 %v197
    %v237 = vunpack.c.l.b16 %v198
    %v238 = vunpack.c.l.b16 %v199
    %v239 = vunpack.c.l.b16 %v200
    %v240 = vunpack.c.l.b16 %v201
    %v241 = vunpack.c.l.b16 %v202
    %v242 = vpack.c.b16 %v227, %v226
    %v243 = vpack.c.b16 %v229, %v228
    %v244 = vpack.c.b16 %v231, %v230
    %v245 = vpack.c.b16 %v233, %v232
    %v246 = vpack.c.b16 %v235, %v234
    %v247 = vpack.c.b16 %v237, %v236
    %v248 = vpack.c.b16 %v239, %v238
    %v249 = vpack.c.b16 %v241, %v240
    %258 = vmatprep.subr.bf16.mxu0 0
    %259 = vmatpush1.bf16.msra.mxu0 %v242
    %260 = vmatprep.subr.bf16.mxu0 0
    %261 = vmatpush1.bf16.msra.mxu0 %v243
    %262 = vmatprep.subr.bf16.mxu0 0
    %263 = vmatpush1.bf16.msra.mxu0 %v244
    %264 = vmatprep.subr.bf16.mxu0 0
    %265 = vmatpush1.bf16.msra.mxu0 %v245
    %266 = vmatprep.subr.bf16.mxu0 0
    %267 = vmatpush1.bf16.msra.mxu0 %v246
    %268 = vmatprep.subr.bf16.mxu0 0
    %269 = vmatpush1.bf16.msra.mxu0 %v247
    %270 = vmatprep.subr.bf16.mxu0 0
    %271 = vmatpush1.bf16.msra.mxu0 %v248
    %272 = vmatprep.subr.bf16.mxu0 0
    %273 = vmatpush1.bf16.msra.mxu0 %v249
    %274 = vmatprep.subr.bf16.mxu0 0
    %275 = vmatpush1.bf16.msra.mxu0 0
    %276 = vmatprep.subr.bf16.mxu0 0
    %277 = vmatpush1.bf16.msra.mxu0 0
    %278 = vmatprep.subr.bf16.mxu0 0
    %279 = vmatpush1.bf16.msra.mxu0 0
    %280 = vmatprep.subr.bf16.mxu0 0
    %281 = vmatpush1.bf16.msra.mxu0 0
    %282 = vmatprep.subr.bf16.mxu0 0
    %283 = vmatpush1.bf16.msra.mxu0 0
    %284 = vmatprep.subr.bf16.mxu0 0
    %285 = vmatpush1.bf16.msra.mxu0 0
    %286 = vmatprep.subr.bf16.mxu0 0
    %287 = vmatpush1.bf16.msra.mxu0 0
    %288 = vmatprep.subr.bf16.mxu0 0
    %289 = vmatpush1.bf16.msra.mxu0 0
    %290 = vmatprep.mubr.bf16.mxu0 0
    %291 = vmatmul.mubr.bf16.gmra.mrb[0].mxu0 %v186
    %v292 = vpop.f32.mrb[0].mxu0
    %v293 = vadd.f32 %v208, %v292
    %v294 = vpop.f32.mrb[0].mxu0
    %v295 = vpop.f32.mrb[0].mxu0
    %v296 = vadd.f32 %v208, %v295
    %v297 = vpop.f32.mrb[0].mxu0
    %298 = vdwg.mxu0
    %v299 = vadd.f32 %v293, %v69
    %v300 = vadd.f32 %v296, %v70
    %v301 = vld [vmem:[%s5] sm:$0x1]
    %v302 = vld [vmem:[%s6] sm:$0x1]
    %303 = vadd.xlane.f32.xlu0 %v299
    %v304 = vpop.xlane.xlu0 %303
    %305 = vadd.xlane.f32.xlu0 %v300
    %v306 = vpop.xlane.xlu0 %305
    %v307 = vmul.f32 %v304, 0.03125
    %v308 = vmul.f32 %v306, 0.03125
    %v309 = vsub.f32 %v299, %v307
    %v310 = vsub.f32 %v300, %v308
    %v311 = vlaneseq
    %v312 = vand.u32 %v311, 127
    %vm313 = vcmp.lt.s32.totalorder %v312, 32
    %v314 = vsel %vm313, %v309, 0.0
    %v315 = vsel %vm313, %v310, 0.0
    %v316 = vmul.f32 %v314, %v314
    %v317 = vmul.f32 %v315, %v315
    %318 = vadd.xlane.f32.xlu0 %v316
    %v319 = vpop.xlane.xlu0 %318
    %320 = vadd.xlane.f32.xlu0 %v317
    %v321 = vpop.xlane.xlu0 %320
    %v322 = vmul.f32 %v319, 0.03125
    %v323 = vmul.f32 %v321, 0.03125
    %v324 = vadd.f32 %v322, 1e-05
    %v325 = vadd.f32 %v323, 1e-05
    %v326 = vrsqrt.pop %v324
    %v327 = vrsqrt.pop %v325
    %v328 = vmul.f32 %v314, %v326
    %v329 = vmul.f32 %v315, %v327
    %v331 = vlaneseq
    %v332 = vshrl.u32 %v331, 7
    %v333 = vsub.s32 0, %v332
    %v334 = vrot.slane %v301, %v333
    %v336 = vmul.f32 %v328, %v334
    %v337 = vmul.f32 %v329, %v334
    %v339 = vlaneseq
    %v340 = vshrl.u32 %v339, 7
    %v341 = vsub.s32 0, %v340
    %v342 = vrot.slane %v302, %v341
    %v344 = vadd.f32 %v336, %v342
    %v345 = vadd.f32 %v337, %v342
    %346 = vst [vmem:[#allocation8] sm:$0xff] %v344
    %347 = vst [vmem:[#allocation8 + $0x8] sm:$0xff] %v345
    // Predicated region
    $region42: #{tpu_custom_call.1} parent=1 // pred_check
      _
    $region43: #{tpu_custom_call.1} parent=1 // pred_check_branch
      %349 = sbr.rel (0) target = $region45
    $region44: #{tpu_custom_call.1} parent=1 // pred_region
      %s351 = ssub.s32 256, 256
      %352 = vsyncadd [#allocation4], %s351
      %s353 = sshll.u32 [#allocation8], 4
      %s354 = int_to_ptr.vmem [resolvable:$true] %s353
      %359 = dma.vmem_to_hbm [thread:$0]  %s354, 256, %s7, [#allocation4], 128, 128, 8
    $region45: #{tpu_custom_call.1} parent=1 // pred_fallthru
      _
    // Predicated region
    $region46: #{tpu_custom_call.1} parent=1 // pred_check
      _
    $region47: #{tpu_custom_call.1} parent=1 // pred_check_branch
      %361 = sbr.rel (0) target = $region49
    $region48: #{tpu_custom_call.1} parent=1 // pred_region
      %362 = dma.done [#allocation4], 256
    $region49: #{tpu_custom_call.1} parent=1 // pred_fallthru
      _
    %363 = vsyncpa [#allocation3], 1
    %364 = vsyncpa [#allocation6], 1
    %365 = vsyncpa [#allocation4], 1

</llo_original>
